<compile_context>
chip_gen: v7x
topology: tpu7x:2x2x1
jax: 0.10.0
libtpu: 0.0.40
codegen_flags: <defaults>
</compile_context>

<pallas_src>
from functools import partial

import jax
import jax.numpy as jnp
from jax.experimental import pallas as pl
from jax.experimental.pallas import tpu as pltpu


def _dropout_bits(seed_i32, row0, col0, total_cols, shape):
    """uint32 hash of a global (row, col) counter -> per-element random bits.

    Layers use disjoint column ranges of a [N, fc1+fc2] virtual counter grid,
    so the two dropout masks never share bits.
    """
    r = jax.lax.broadcasted_iota(jnp.int32, shape, 0) + row0
    c = jax.lax.broadcasted_iota(jnp.int32, shape, 1) + col0
    # mix seed in int32 (wraps), then hash in uint32 (lowbias32 finalizer)
    h = (r * total_cols + c + seed_i32 * jnp.int32(-1640531527)).astype(jnp.uint32)
    h = h ^ (h >> 16)
    h = h * jnp.uint32(0x7FEB352D)
    h = h ^ (h >> 15)
    h = h * jnp.uint32(0x846CA68B)
    h = h ^ (h >> 16)
    return h


def prenet_kernel(seed_ref, x_ref, w1_ref, b1_ref, w2_ref, b2_ref, o_ref, *,
                  p, block_rows, fc1_dims, fc2_dims):
    inv_keep = jnp.float32(1.0 / (1.0 - p))
    # keep iff bits >= round(p * 2^32)  ->  P(keep) = 1 - p  (pure int compare)
    thresh = jnp.uint32(min(int(round(p * (1 << 32))), (1 << 32) - 1))

    seed = seed_ref[0]
    row0 = pl.program_id(0) * block_rows
    total_cols = fc1_dims + fc2_dims

    # --- fc1: bf16 MXU matmul, f32 accumulate; bias/ReLU/dropout in f32 ---
    h = jnp.dot(x_ref[...].astype(jnp.bfloat16), w1_ref[...],
                preferred_element_type=jnp.float32)
    h = jnp.maximum(h + b1_ref[...], 0.0)
    keep1 = _dropout_bits(seed, row0, 0, total_cols, h.shape) >= thresh
    h = jnp.where(keep1, h * inv_keep, 0.0)

    # --- fc2: same pattern ---
    y = jnp.dot(h.astype(jnp.bfloat16), w2_ref[...],
                preferred_element_type=jnp.float32)
    y = jnp.maximum(y + b2_ref[...], 0.0)
    keep2 = _dropout_bits(seed, row0, fc1_dims, total_cols, y.shape) >= thresh
    y = jnp.where(keep2, y * inv_keep, 0.0)

    o_ref[...] = y.astype(o_ref.dtype)


def prenet_forward(x, w1, b1, w2, b2, seed, *, p=0.5, block_rows=512):
    """x: [N, in_dims] float32. Returns [N, fc2_dims] float32 (training-mode dropout)."""
    N, in_dims = x.shape
    fc1_dims = w1.shape[1]
    fc2_dims = w2.shape[1]
    assert 0.0 <= p < 1.0

    # Clamp the row tile for tiny inputs (multiple of 8 sublanes), pad N so the
    # grid is exact and the output store stays lane-dense / unmasked.
    block_rows = max(8, min(block_rows, ((N + 7) // 8) * 8))
    n_pad = pl.cdiv(N, block_rows) * block_rows
    if n_pad != N:
        x = jnp.pad(x, ((0, n_pad - N), (0, 0)))

    grid = (n_pad // block_rows,)

    # VMEM @ block_rows=512: x tile 64 KiB, out tile 256 KiB, bf16 weights
    # ~80 KiB -> far below the 32 MiB scoped default on v5e/v6e/v7x.
    out = pl.pallas_call(
        partial(prenet_kernel, p=p, block_rows=block_rows,
                fc1_dims=fc1_dims, fc2_dims=fc2_dims),
        out_shape=jax.ShapeDtypeStruct((n_pad, fc2_dims), jnp.float32),
        grid_spec=pltpu.PrefetchScalarGridSpec(
            num_scalar_prefetch=1,            # seed lands in SMEM
            grid=grid,
            in_specs=[
                pl.BlockSpec((block_rows, in_dims), lambda i, seed: (i, 0)),
                pl.BlockSpec((in_dims, fc1_dims), lambda i, seed: (0, 0)),
                pl.BlockSpec((1, fc1_dims), lambda i, seed: (0, 0)),
                pl.BlockSpec((fc1_dims, fc2_dims), lambda i, seed: (0, 0)),
                pl.BlockSpec((1, fc2_dims), lambda i, seed: (0, 0)),
            ],
            out_specs=pl.BlockSpec((block_rows, fc2_dims),
                                   lambda i, seed: (i, 0)),
        ),
        compiler_params=pltpu.CompilerParams(
            dimension_semantics=("parallel",)),   # rows independent -> v7x 2 TCs
    )(jnp.asarray([seed], dtype=jnp.int32),
      x.astype(jnp.float32),
      w1.astype(jnp.bfloat16), b1.reshape(1, -1).astype(jnp.float32),
      w2.astype(jnp.bfloat16), b2.reshape(1, -1).astype(jnp.float32))
    return out[:N]


if __name__ == "__main__":
    # Small shapes consistent with the module: batch=2, seq=8, in_dims=32
    batch, seq, in_dims = 2, 8, 32
    fc1_dims, fc2_dims = 256, 128
    p = 0.5

    key = jax.random.PRNGKey(0)
    kx, k1, k2, k3, k4 = jax.random.split(key, 5)

    x = jax.random.normal(kx, (batch, seq, in_dims), dtype=jnp.float32)

    # Deterministic PyTorch-Linear-style init: U(-1/sqrt(fan_in), 1/sqrt(fan_in))
    lim1 = 1.0 / jnp.sqrt(in_dims)
    lim2 = 1.0 / jnp.sqrt(fc1_dims)
    w1 = jax.random.uniform(k1, (in_dims, fc1_dims), jnp.float32, -lim1, lim1)
    b1 = jax.random.uniform(k2, (fc1_dims,), jnp.float32, -lim1, lim1)
    w2 = jax.random.uniform(k3, (fc1_dims, fc2_dims), jnp.float32, -lim2, lim2)
    b2 = jax.random.uniform(k4, (fc2_dims,), jnp.float32, -lim2, lim2)

    x2d = x.reshape(batch * seq, in_dims)
    out2d = prenet_forward(x2d, w1, b1, w2, b2, seed=1234, p=p)
    out = out2d.reshape(batch, seq, fc2_dims)
    jax.block_until_ready(out)

    assert out.shape == (batch, seq, fc2_dims)
    assert out.dtype == jnp.float32
    assert bool(jnp.all(jnp.isfinite(out)))
    # ReLU + p=0.5 dropout should zero a nontrivial fraction but not everything
    frac_zero = float(jnp.mean(out == 0.0))
    assert 0.0 < frac_zero < 1.0

    print("KERNEL_OK")
</pallas_src>

<mosaic_0001>
module attributes {stable_mosaic.version = 11 : i64} {
  func.func @prenet_kernel(%arg0: i32, %arg1: memref<1xi32, #tpu.memory_space<smem>>, %arg2: memref<16x32xf32, #tpu.memory_space<vmem>>, %arg3: memref<32x256xbf16, #tpu.memory_space<vmem>>, %arg4: memref<1x256xf32, #tpu.memory_space<vmem>>, %arg5: memref<256x128xbf16, #tpu.memory_space<vmem>>, %arg6: memref<1x128xf32, #tpu.memory_space<vmem>>, %arg7: memref<16x128xf32, #tpu.memory_space<vmem>>) attributes {dimension_semantics = [#tpu.dimension_semantics<parallel>], iteration_bounds = array<i64: 1>, scalar_prefetch = 1 : i64, scratch_operands = 0 : i64, tpu.core_type = #tpu.core_type<tc>, window_params = [{transform_indices = @transform_0, window_bounds = array<i64: 16, 32>}, {pipeline_mode = #tpu.pipeline_mode<synchronous>, transform_indices = @transform_1, window_bounds = array<i64: 32, 256>}, {pipeline_mode = #tpu.pipeline_mode<synchronous>, transform_indices = @transform_2, window_bounds = array<i64: 1, 256>}, {pipeline_mode = #tpu.pipeline_mode<synchronous>, transform_indices = @transform_3, window_bounds = array<i64: 256, 128>}, {pipeline_mode = #tpu.pipeline_mode<synchronous>, transform_indices = @transform_4, window_bounds = array<i64: 1, 128>}, {transform_indices = @transform_5, window_bounds = array<i64: 16, 128>}]} {
    %c0 = arith.constant 0 : index
    %0 = memref.load %arg1[%c0] : memref<1xi32, #tpu.memory_space<smem>>
    %c16_i32 = arith.constant 16 : i32
    %1 = arith.muli %arg0, %c16_i32 : i32
    %c0_0 = arith.constant 0 : index
    %c0_1 = arith.constant 0 : index
    %2 = vector.load %arg2[%c0_0, %c0_1] : memref<16x32xf32, #tpu.memory_space<vmem>>, vector<16x32xf32>
    %3 = arith.truncf %2 : vector<16x32xf32> to vector<16x32xbf16>
    %c0_2 = arith.constant 0 : index
    %c0_3 = arith.constant 0 : index
    %4 = vector.load %arg3[%c0_2, %c0_3] : memref<32x256xbf16, #tpu.memory_space<vmem>>, vector<32x256xbf16>
    %cst = arith.constant dense<0.000000e+00> : vector<16x256xf32>
    %5 = tpu.matmul %3, %4, %cst {dimension_numbers = #tpu.dot_dimension_numbers<[1], [0], [0], [1], [0, 0, 1, 1], [], []>} : vector<16x32xbf16>, vector<32x256xbf16>, vector<16x256xf32> -> vector<16x256xf32>
    %c0_4 = arith.constant 0 : index
    %c0_5 = arith.constant 0 : index
    %6 = vector.load %arg4[%c0_4, %c0_5] : memref<1x256xf32, #tpu.memory_space<vmem>>, vector<1x256xf32>
    %7 = vector.broadcast %6 : vector<1x256xf32> to vector<16x256xf32>
    %8 = arith.addf %5, %7 : vector<16x256xf32>
    %cst_6 = arith.constant 0.000000e+00 : f32
    %9 = vector.broadcast %cst_6 : f32 to vector<16x256xf32>
    %10 = arith.maximumf %8, %9 : vector<16x256xf32>
    %11 = tpu.iota {dimensions = array<i32: 0>} : vector<16x256xi32>
    %12 = vector.broadcast %1 : i32 to vector<16x256xi32>
    %13 = arith.addi %11, %12 : vector<16x256xi32>
    %14 = tpu.iota {dimensions = array<i32: 1>} : vector<16x256xi32>
    %c0_i32 = arith.constant 0 : i32
    %15 = vector.broadcast %c0_i32 : i32 to vector<16x256xi32>
    %16 = arith.addi %14, %15 : vector<16x256xi32>
    %c384_i32 = arith.constant 384 : i32
    %17 = vector.broadcast %c384_i32 : i32 to vector<16x256xi32>
    %18 = arith.muli %13, %17 : vector<16x256xi32>
    %19 = arith.addi %18, %16 : vector<16x256xi32>
    %c-1640531527_i32 = arith.constant -1640531527 : i32
    %20 = arith.muli %0, %c-1640531527_i32 : i32
    %21 = vector.broadcast %20 : i32 to vector<16x256xi32>
    %22 = arith.addi %19, %21 : vector<16x256xi32>
    %c16_i32_7 = arith.constant 16 : i32
    %23 = vector.broadcast %c16_i32_7 : i32 to vector<16x256xi32>
    %24 = arith.shrui %22, %23 : vector<16x256xi32>
    %25 = arith.xori %22, %24 : vector<16x256xi32>
    %c2146121005_i32 = arith.constant 2146121005 : i32
    %26 = vector.broadcast %c2146121005_i32 : i32 to vector<16x256xi32>
    %27 = arith.muli %25, %26 : vector<16x256xi32>
    %c15_i32 = arith.constant 15 : i32
    %28 = vector.broadcast %c15_i32 : i32 to vector<16x256xi32>
    %29 = arith.shrui %27, %28 : vector<16x256xi32>
    %30 = arith.xori %27, %29 : vector<16x256xi32>
    %c-2073254261_i32 = arith.constant -2073254261 : i32
    %31 = vector.broadcast %c-2073254261_i32 : i32 to vector<16x256xi32>
    %32 = arith.muli %30, %31 : vector<16x256xi32>
    %c16_i32_8 = arith.constant 16 : i32
    %33 = vector.broadcast %c16_i32_8 : i32 to vector<16x256xi32>
    %34 = arith.shrui %32, %33 : vector<16x256xi32>
    %35 = arith.xori %32, %34 : vector<16x256xi32>
    %c-2147483648_i32 = arith.constant -2147483648 : i32
    %36 = vector.broadcast %c-2147483648_i32 : i32 to vector<16x256xi32>
    %37 = arith.cmpi uge, %35, %36 : vector<16x256xi32>
    %cst_9 = arith.constant 2.000000e+00 : f32
    %38 = vector.broadcast %cst_9 : f32 to vector<16x256xf32>
    %39 = arith.mulf %10, %38 : vector<16x256xf32>
    %cst_10 = arith.constant 0.000000e+00 : f32
    %40 = vector.broadcast %cst_10 : f32 to vector<16x256xf32>
    %41 = arith.select %37, %39, %40 : vector<16x256xi1>, vector<16x256xf32>
    %42 = arith.truncf %41 : vector<16x256xf32> to vector<16x256xbf16>
    %c0_11 = arith.constant 0 : index
    %c0_12 = arith.constant 0 : index
    %43 = vector.load %arg5[%c0_11, %c0_12] : memref<256x128xbf16, #tpu.memory_space<vmem>>, vector<256x128xbf16>
    %cst_13 = arith.constant dense<0.000000e+00> : vector<16x128xf32>
    %44 = tpu.matmul %42, %43, %cst_13 {dimension_numbers = #tpu.dot_dimension_numbers<[1], [0], [0], [1], [0, 0, 1, 1], [], []>} : vector<16x256xbf16>, vector<256x128xbf16>, vector<16x128xf32> -> vector<16x128xf32>
    %c0_14 = arith.constant 0 : index
    %c0_15 = arith.constant 0 : index
    %45 = vector.load %arg6[%c0_14, %c0_15] : memref<1x128xf32, #tpu.memory_space<vmem>>, vector<1x128xf32>
    %46 = vector.broadcast %45 : vector<1x128xf32> to vector<16x128xf32>
    %47 = arith.addf %44, %46 : vector<16x128xf32>
    %cst_16 = arith.constant 0.000000e+00 : f32
    %48 = vector.broadcast %cst_16 : f32 to vector<16x128xf32>
    %49 = arith.maximumf %47, %48 : vector<16x128xf32>
    %50 = tpu.iota {dimensions = array<i32: 0>} : vector<16x128xi32>
    %51 = vector.broadcast %1 : i32 to vector<16x128xi32>
    %52 = arith.addi %50, %51 : vector<16x128xi32>
    %53 = tpu.iota {dimensions = array<i32: 1>} : vector<16x128xi32>
    %c256_i32 = arith.constant 256 : i32
    %54 = vector.broadcast %c256_i32 : i32 to vector<16x128xi32>
    %55 = arith.addi %53, %54 : vector<16x128xi32>
    %c384_i32_17 = arith.constant 384 : i32
    %56 = vector.broadcast %c384_i32_17 : i32 to vector<16x128xi32>
    %57 = arith.muli %52, %56 : vector<16x128xi32>
    %58 = arith.addi %57, %55 : vector<16x128xi32>
    %c-1640531527_i32_18 = arith.constant -1640531527 : i32
    %59 = arith.muli %0, %c-1640531527_i32_18 : i32
    %60 = vector.broadcast %59 : i32 to vector<16x128xi32>
    %61 = arith.addi %58, %60 : vector<16x128xi32>
    %c16_i32_19 = arith.constant 16 : i32
    %62 = vector.broadcast %c16_i32_19 : i32 to vector<16x128xi32>
    %63 = arith.shrui %61, %62 : vector<16x128xi32>
    %64 = arith.xori %61, %63 : vector<16x128xi32>
    %c2146121005_i32_20 = arith.constant 2146121005 : i32
    %65 = vector.broadcast %c2146121005_i32_20 : i32 to vector<16x128xi32>
    %66 = arith.muli %64, %65 : vector<16x128xi32>
    %c15_i32_21 = arith.constant 15 : i32
    %67 = vector.broadcast %c15_i32_21 : i32 to vector<16x128xi32>
    %68 = arith.shrui %66, %67 : vector<16x128xi32>
    %69 = arith.xori %66, %68 : vector<16x128xi32>
    %c-2073254261_i32_22 = arith.constant -2073254261 : i32
    %70 = vector.broadcast %c-2073254261_i32_22 : i32 to vector<16x128xi32>
    %71 = arith.muli %69, %70 : vector<16x128xi32>
    %c16_i32_23 = arith.constant 16 : i32
    %72 = vector.broadcast %c16_i32_23 : i32 to vector<16x128xi32>
    %73 = arith.shrui %71, %72 : vector<16x128xi32>
    %74 = arith.xori %71, %73 : vector<16x128xi32>
    %c-2147483648_i32_24 = arith.constant -2147483648 : i32
    %75 = vector.broadcast %c-2147483648_i32_24 : i32 to vector<16x128xi32>
    %76 = arith.cmpi uge, %74, %75 : vector<16x128xi32>
    %cst_25 = arith.constant 2.000000e+00 : f32
    %77 = vector.broadcast %cst_25 : f32 to vector<16x128xf32>
    %78 = arith.mulf %49, %77 : vector<16x128xf32>
    %cst_26 = arith.constant 0.000000e+00 : f32
    %79 = vector.broadcast %cst_26 : f32 to vector<16x128xf32>
    %80 = arith.select %76, %78, %79 : vector<16x128xi1>, vector<16x128xf32>
    %c0_27 = arith.constant 0 : index
    %c0_28 = arith.constant 0 : index
    %81 = vector.load %arg7[%c0_27, %c0_28] : memref<16x128xf32, #tpu.memory_space<vmem>>, vector<16x128xf32>
    tpu.vector_store %arg7[%c0_27, %c0_28], %80 {strides = array<i32>} : memref<16x128xf32, #tpu.memory_space<vmem>>, vector<16x128xf32>,
    return
  }
  func.func @transform_0(%arg0: i32, %arg1: memref<1xi32, #tpu.memory_space<smem>>) -> (i32, i32) {
    %c0_i32 = arith.constant 0 : i32
    %c0_i32_0 = arith.constant 0 : i32
    return %arg0, %c0_i32 : i32, i32
  }
  func.func @transform_1(%arg0: i32, %arg1: memref<1xi32, #tpu.memory_space<smem>>) -> (i32, i32) {
    %c0_i32 = arith.constant 0 : i32
    %c0_i32_0 = arith.constant 0 : i32
    %c0_i32_1 = arith.constant 0 : i32
    return %c0_i32, %c0_i32_0 : i32, i32
  }
  func.func @transform_2(%arg0: i32, %arg1: memref<1xi32, #tpu.memory_space<smem>>) -> (i32, i32) {
    %c0_i32 = arith.constant 0 : i32
    %c0_i32_0 = arith.constant 0 : i32
    %c0_i32_1 = arith.constant 0 : i32
    return %c0_i32, %c0_i32_0 : i32, i32
  }
  func.func @transform_3(%arg0: i32, %arg1: memref<1xi32, #tpu.memory_space<smem>>) -> (i32, i32) {
    %c0_i32 = arith.constant 0 : i32
    %c0_i32_0 = arith.constant 0 : i32
    %c0_i32_1 = arith.constant 0 : i32
    return %c0_i32, %c0_i32_0 : i32, i32
  }
  func.func @transform_4(%arg0: i32, %arg1: memref<1xi32, #tpu.memory_space<smem>>) -> (i32, i32) {
    %c0_i32 = arith.constant 0 : i32
    %c0_i32_0 = arith.constant 0 : i32
    %c0_i32_1 = arith.constant 0 : i32
    return %c0_i32, %c0_i32_0 : i32, i32
  }
  func.func @transform_5(%arg0: i32, %arg1: memref<1xi32, #tpu.memory_space<smem>>) -> (i32, i32) {
    %c0_i32 = arith.constant 0 : i32
    %c0_i32_0 = arith.constant 0 : i32
    return %arg0, %c0_i32 : i32, i32
  }
}

</mosaic_0001>

<llo_original>
// kernel: tpu_custom_call.1
$region0: #{tpu_custom_call.1}
  #allocation0 [shape = 'u32[]', space=smem, size = 0x4, offset = 0x4, fixed_abs, tag = 'smem constant byte address 0x4 - core index']
  #allocation1 [shape = 'u32[144,128]{1,0:T(1,128)}', space=vmem, size = 0x12000, scoped, tag = 'internal scratch']
  #allocation2 [shape = 's32[1]{0}', space=sflag, size = 0x4, scoped, tag = 'scoped memory for tpu_custom_call.1']
  #allocation3 [shape = 's32[1]{0:T(128)S(6)}', space=smem, size = 0x200, scoped, tag = 'prefetched SMEM operand 0']
  %s0 = inlined_call_operand.<no memory space> [shape: s32[1], index: 0, kind: input, shape index: {}]
  %s1 = inlined_call_operand.hbm [shape: f32[16,32], index: 1, kind: input, shape index: {}]
  %s2 = inlined_call_operand.hbm [shape: bf16[32,256], index: 2, kind: input, shape index: {}]
  %s3 = inlined_call_operand.vmem [shape: f32[1,256], index: 3, kind: input, shape index: {}]
  %s4 = inlined_call_operand.hbm [shape: bf16[256,128], index: 4, kind: input, shape index: {}]
  %s5 = inlined_call_operand.vmem [shape: f32[1,128], index: 5, kind: input, shape index: {}]
  %s6 = inlined_call_operand.hbm [shape: f32[16,128], index: 6, kind: output, shape index: {}]
  %s7 = sld [smem:[#allocation0]]
  $region42: #{tpu_custom_call.1} parent=0
    _
  %s9 = ssub.s32 1, %s7
  %s10 = scalar_select 0, %s9, %s7
  %11 = sst [smem:[#allocation3]] %s0
  $region1: #{tpu_custom_call.1} parent=0
    #allocation4 [shape = 'u8[8192]{0}', space=vmem, size = 0x2000, scoped, tag = 'input window, operand 1, single buffered']
    #allocation5 [shape = 's32[1]{0}', space=sflag, size = 0x4, scoped, tag = 'scoped memory for tpu_custom_call.1']
    #allocation6 [shape = 's32[1]{0}', space=sflag, size = 0x4, scoped, tag = 'scoped memory for tpu_custom_call.1']
    #allocation7 [shape = 'u8[16384]{0}', space=vmem, size = 0x4000, scoped, tag = 'input window, operand 2, single buffered']
    #allocation8 [shape = 's32[1]{0}', space=sflag, size = 0x4, scoped, tag = 'scoped memory for tpu_custom_call.1']
    #allocation9 [shape = 'u8[65536]{0}', space=vmem, size = 0x10000, scoped, tag = 'input window, operand 4, single buffered']
    #allocation10 [shape = 'u8[8192]{0}', space=vmem, size = 0x2000, scoped, tag = 'output window, operand 0, single buffered']
    %12 = vsyncpa [#allocation5], 0
    %13 = vsyncpa [#allocation8], 0
    %14 = vsyncpa [#allocation6], 0
    // Predicated region
    $region2: #{tpu_custom_call.1} parent=1 // pred_check
      _
    $region3: #{tpu_custom_call.1} parent=1 // pred_check_branch
      %16 = sbr.rel (0) target = $region5
    $region4: #{tpu_custom_call.1} parent=1 // pred_region
      %s18 = ssub.s32 256, 256
      %19 = vsyncadd [#allocation5], %s18
      %s20 = sshll.u32 [#allocation4], 4
      %s21 = int_to_ptr.vmem [resolvable:$true] %s20
      %26 = dma.hbm_to_vmem [thread:$0]  %s1, 256, %s21, [#allocation5], 128, 128, 8
    $region5: #{tpu_custom_call.1} parent=1 // pred_fallthru
      _
    // Predicated region
    $region6: #{tpu_custom_call.1} parent=1 // pred_check
      _
    $region7: #{tpu_custom_call.1} parent=1 // pred_check_branch
      %28 = sbr.rel (0) target = $region9
    $region8: #{tpu_custom_call.1} parent=1 // pred_region
      %s30 = ssub.s32 512, 512
      %31 = vsyncadd [#allocation8], %s30
      %s32 = sshll.u32 [#allocation7], 4
      %s33 = int_to_ptr.vmem [resolvable:$true] %s32
      %38 = dma.hbm_to_vmem [thread:$0]  %s2, 512, %s33, [#allocation8], 128, 128, 8
    $region9: #{tpu_custom_call.1} parent=1 // pred_fallthru
      _
    // Predicated region
    $region10: #{tpu_custom_call.1} parent=1 // pred_check
      _
    $region11: #{tpu_custom_call.1} parent=1 // pred_check_branch
      %40 = sbr.rel (0) target = $region13
    $region12: #{tpu_custom_call.1} parent=1 // pred_region
      _
    $region13: #{tpu_custom_call.1} parent=1 // pred_fallthru
      _
    // Predicated region
    $region14: #{tpu_custom_call.1} parent=1 // pred_check
      _
    $region15: #{tpu_custom_call.1} parent=1 // pred_check_branch
      %42 = sbr.rel (0) target = $region17
    $region16: #{tpu_custom_call.1} parent=1 // pred_region
      %s44 = ssub.s32 2048, 2048
      %45 = vsyncadd [#allocation8], %s44
      %s46 = sshll.u32 [#allocation9], 4
      %s47 = int_to_ptr.vmem [resolvable:$true] %s46
      %52 = dma.hbm_to_vmem [thread:$0]  %s4, 2048, %s47, [#allocation8], 64, 64, 4
    $region17: #{tpu_custom_call.1} parent=1 // pred_fallthru
      _
    // Predicated region
    $region18: #{tpu_custom_call.1} parent=1 // pred_check
      _
    $region19: #{tpu_custom_call.1} parent=1 // pred_check_branch
      %54 = sbr.rel (0) target = $region21
    $region20: #{tpu_custom_call.1} parent=1 // pred_region
      _
    $region21: #{tpu_custom_call.1} parent=1 // pred_fallthru
      _
    // Predicated region
    $region22: #{tpu_custom_call.1} parent=1 // pred_check
      _
    $region23: #{tpu_custom_call.1} parent=1 // pred_check_branch
      %56 = sbr.rel (0) target = $region25
    $region24: #{tpu_custom_call.1} parent=1 // pred_region
      %57 = dma.done [#allocation5], 256
    $region25: #{tpu_custom_call.1} parent=1 // pred_fallthru
      _
    // Predicated region
    $region26: #{tpu_custom_call.1} parent=1 // pred_check
      _
    $region27: #{tpu_custom_call.1} parent=1 // pred_check_branch
      %59 = sbr.rel (0) target = $region29
    $region28: #{tpu_custom_call.1} parent=1 // pred_region
      %60 = dma.done [#allocation8], 512
    $region29: #{tpu_custom_call.1} parent=1 // pred_fallthru
      _
    // Predicated region
    $region30: #{tpu_custom_call.1} parent=1 // pred_check
      _
    $region31: #{tpu_custom_call.1} parent=1 // pred_check_branch
      %62 = sbr.rel (0) target = $region33
    $region32: #{tpu_custom_call.1} parent=1 // pred_region
      %63 = dma.done [#allocation8], 2048
    $region33: #{tpu_custom_call.1} parent=1 // pred_fallthru
      _
    %s65 = sld [smem:[#allocation3]]
    %s66 = smul.u32 0, 16
    %v67 = vld [vmem:[#allocation4] sm:$0xff]
    %v68 = vld [vmem:[#allocation4 + $0x8] sm:$0xff]
    %v69 = vpack.c.bf16 %v68, %v67
    %v70 = vld [vmem:[#allocation7] sm:$0xff]
    %v71 = vld [vmem:[#allocation7 + $0x8] sm:$0xff]
    %v72 = vld [vmem:[#allocation7 + $0x10] sm:$0xff]
    %v73 = vld [vmem:[#allocation7 + $0x18] sm:$0xff]
    %v74 = vld [vmem:[%s3] sm:$0x3]
    %v76 = vlaneseq
    %v77 = vshrl.u32 %v76, 7
    %v78 = vsub.s32 0, %v77
    %v79 = vrot.slane %v74, %v78
    %v80 = vlaneseq
    %v81 = vshrl.u32 %v80, 7
    %v82 = vsub.s32 1, %v81
    %v83 = vrot.slane %v74, %v82
    %v90 = vunpack.c.l.b16 %v70
    %v91 = vunpack.c.h.b16 %v70
    %v92 = vunpack.c.l.b16 %v71
    %v93 = vunpack.c.h.b16 %v71
    %v94 = vunpack.c.l.b16 %v72
    %v95 = vunpack.c.h.b16 %v72
    %v96 = vunpack.c.l.b16 %v73
    %v97 = vunpack.c.h.b16 %v73
    %v98 = vpack.c.b16 %v92, %v90
    %v99 = vpack.c.b16 %v93, %v91
    %v100 = vpack.c.b16 %v96, %v94
    %v101 = vpack.c.b16 %v97, %v95
    %vm106 = vcmask 261120
    %v108 = vsel %vm106, %v69, 0
    %110 = vmatprep.subr.bf16.mxu0 %v99
    %111 = vmatpush1.bf16.msra.mxu0 %v98
    %112 = vmatprep.subr.bf16.mxu0 %v101
    %113 = vmatpush1.bf16.msra.mxu0 %v100
    %114 = vmatprep.subr.bf16.mxu0 0
    %115 = vmatpush1.bf16.msra.mxu0 0
    %116 = vmatprep.subr.bf16.mxu0 0
    %117 = vmatpush1.bf16.msra.mxu0 0
    %118 = vmatprep.subr.bf16.mxu0 0
    %119 = vmatpush1.bf16.msra.mxu0 0
    %120 = vmatprep.subr.bf16.mxu0 0
    %121 = vmatpush1.bf16.msra.mxu0 0
    %122 = vmatprep.subr.bf16.mxu0 0
    %123 = vmatpush1.bf16.msra.mxu0 0
    %124 = vmatprep.subr.bf16.mxu0 0
    %125 = vmatpush1.bf16.msra.mxu0 0
    %126 = vmatprep.subr.bf16.mxu0 0
    %127 = vmatpush1.bf16.msra.mxu0 0
    %128 = vmatprep.subr.bf16.mxu0 0
    %129 = vmatpush1.bf16.msra.mxu0 0
    %130 = vmatprep.subr.bf16.mxu0 0
    %131 = vmatpush1.bf16.msra.mxu0 0
    %132 = vmatprep.subr.bf16.mxu0 0
    %133 = vmatpush1.bf16.msra.mxu0 0
    %134 = vmatprep.subr.bf16.mxu0 0
    %135 = vmatpush1.bf16.msra.mxu0 0
    %136 = vmatprep.subr.bf16.mxu0 0
    %137 = vmatpush1.bf16.msra.mxu0 0
    %138 = vmatprep.subr.bf16.mxu0 0
    %139 = vmatpush1.bf16.msra.mxu0 0
    %140 = vmatprep.subr.bf16.mxu0 0
    %141 = vmatpush1.bf16.msra.mxu0 0
    %142 = vmatprep.mubr.bf16.mxu0 0
    %143 = vmatmul.mubr.bf16.gmra.mrb[0].mxu0 %v108
    %v144 = vpop.f32.mrb[0].mxu0
    %v145 = vadd.f32 %v79, %v144
    %v146 = vpop.f32.mrb[0].mxu0
    %v147 = vadd.f32 %v83, %v146
    %v148 = vpop.f32.mrb[0].mxu0
    %v149 = vadd.f32 %v79, %v148
    %v150 = vpop.f32.mrb[0].mxu0
    %v151 = vadd.f32 %v83, %v150
    %152 = vdwg.mxu0
    %v153 = vmax.f32 %v145, 0.0
    %v154 = vmax.f32 %v147, 0.0
    %v155 = vmax.f32 %v149, 0.0
    %v156 = vmax.f32 %v151, 0.0
    %v157 = vlaneseq
    %v158 = vshrl.u32 %v157, 7
    %v159 = vadd.s32 %v158, 8
    %v160 = vstv %s66
    %v161 = vadd.s32 %v158, %v160
    %v162 = vadd.s32 %v159, %v160
    %v163 = vlaneseq
    %v164 = vand.u32 %v163, 127
    %v165 = vadd.s32 %v164, 128
    %v166 = vmul.u32 %v161, 384
    %v167 = vmul.u32 %v162, 384
    %v168 = vadd.s32 %v166, %v164
    %v169 = vadd.s32 %v166, %v165
    %v170 = vadd.s32 %v167, %v164
    %v171 = vadd.s32 %v167, %v165
    %s172 = smul.u32 %s65, 2654435769
    %v173 = vstv %s172
    %v174 = vadd.s32 %v168, %v173
    %v175 = vadd.s32 %v169, %v173
    %v176 = vadd.s32 %v170, %v173
    %v177 = vadd.s32 %v171, %v173
    %v178 = vshrl.u32 %v174, 16
    %v179 = vshrl.u32 %v175, 16
    %v180 = vshrl.u32 %v176, 16
    %v181 = vshrl.u32 %v177, 16
    %v182 = vxor.u32 %v174, %v178
    %v183 = vxor.u32 %v175, %v179
    %v184 = vxor.u32 %v176, %v180
    %v185 = vxor.u32 %v177, %v181
    %v186 = vmul.u32 %v182, 2146121005
    %v187 = vmul.u32 %v183, 2146121005
    %v188 = vmul.u32 %v184, 2146121005
    %v189 = vmul.u32 %v185, 2146121005
    %v190 = vshrl.u32 %v186, 15
    %v191 = vshrl.u32 %v187, 15
    %v192 = vshrl.u32 %v188, 15
    %v193 = vshrl.u32 %v189, 15
    %v194 = vxor.u32 %v186, %v190
    %v195 = vxor.u32 %v187, %v191
    %v196 = vxor.u32 %v188, %v192
    %v197 = vxor.u32 %v189, %v193
    %v198 = vmul.u32 %v194, 2221713035
    %v199 = vmul.u32 %v195, 2221713035
    %v200 = vmul.u32 %v196, 2221713035
    %v201 = vmul.u32 %v197, 2221713035
    %v202 = vshrl.u32 %v198, 16
    %v203 = vshrl.u32 %v199, 16
    %v204 = vshrl.u32 %v200, 16
    %v205 = vshrl.u32 %v201, 16
    %v206 = vxor.u32 %v198, %v202
    %v207 = vxor.u32 %v199, %v203
    %v208 = vxor.u32 %v200, %v204
    %v209 = vxor.u32 %v201, %v205
    %vm210 = vcmp.ge.u32.totalorder %v206, 2147483648
    %vm211 = vcmp.ge.u32.totalorder %v207, 2147483648
    %vm212 = vcmp.ge.u32.totalorder %v208, 2147483648
    %vm213 = vcmp.ge.u32.totalorder %v209, 2147483648
    %v214 = vmul.f32 %v153, 2.0
    %v215 = vmul.f32 %v154, 2.0
    %v216 = vmul.f32 %v155, 2.0
    %v217 = vmul.f32 %v156, 2.0
    %v218 = vsel %vm210, %v214, 0.0
    %v219 = vsel %vm211, %v215, 0.0
    %v220 = vsel %vm212, %v216, 0.0
    %v221 = vsel %vm213, %v217, 0.0
    %v222 = vpack.c.bf16 %v220, %v218
    %v223 = vpack.c.bf16 %v221, %v219
    %v224 = vld [vmem:[#allocation9] sm:$0xf]
    %v225 = vld [vmem:[#allocation9 + $0x4] sm:$0xf]
    %v226 = vld [vmem:[#allocation9 + $0x8] sm:$0xf]
    %v227 = vld [vmem:[#allocation9 + $0xc] sm:$0xf]
    %v228 = vld [vmem:[#allocation9 + $0x10] sm:$0xf]
    %v229 = vld [vmem:[#allocation9 + $0x14] sm:$0xf]
    %v230 = vld [vmem:[#allocation9 + $0x18] sm:$0xf]
    %v231 = vld [vmem:[#allocation9 + $0x1c] sm:$0xf]
    %v232 = vld [vmem:[#allocation9 + $0x20] sm:$0xf]
    %v233 = vld [vmem:[#allocation9 + $0x24] sm:$0xf]
    %v234 = vld [vmem:[#allocation9 + $0x28] sm:$0xf]
    %v235 = vld [vmem:[#allocation9 + $0x2c] sm:$0xf]
    %v236 = vld [vmem:[#allocation9 + $0x30] sm:$0xf]
    %v237 = vld [vmem:[#allocation9 + $0x34] sm:$0xf]
    %v238 = vld [vmem:[#allocation9 + $0x38] sm:$0xf]
    %v239 = vld [vmem:[#allocation9 + $0x3c] sm:$0xf]
    %v240 = vld [vmem:[#allocation9 + $0x40] sm:$0xf]
    %v241 = vld [vmem:[#allocation9 + $0x44] sm:$0xf]
    %v242 = vld [vmem:[#allocation9 + $0x48] sm:$0xf]
    %v243 = vld [vmem:[#allocation9 + $0x4c] sm:$0xf]
    %v244 = vld [vmem:[#allocation9 + $0x50] sm:$0xf]
    %v245 = vld [vmem:[#allocation9 + $0x54] sm:$0xf]
    %v246 = vld [vmem:[#allocation9 + $0x58] sm:$0xf]
    %v247 = vld [vmem:[#allocation9 + $0x5c] sm:$0xf]
    %v248 = vld [vmem:[#allocation9 + $0x60] sm:$0xf]
    %v249 = vld [vmem:[#allocation9 + $0x64] sm:$0xf]
    %v250 = vld [vmem:[#allocation9 + $0x68] sm:$0xf]
    %v251 = vld [vmem:[#allocation9 + $0x6c] sm:$0xf]
    %v252 = vld [vmem:[#allocation9 + $0x70] sm:$0xf]
    %v253 = vld [vmem:[#allocation9 + $0x74] sm:$0xf]
    %v254 = vld [vmem:[#allocation9 + $0x78] sm:$0xf]
    %v255 = vld [vmem:[#allocation9 + $0x7c] sm:$0xf]
    %v256 = vld [vmem:[%s5] sm:$0x1]
    %v258 = vlaneseq
    %v259 = vshrl.u32 %v258, 7
    %v260 = vsub.s32 0, %v259
    %v261 = vrot.slane %v256, %v260
    %v295 = vunpack.c.l.b16 %v224
    %v296 = vunpack.c.l.b16 %v225
    %v297 = vunpack.c.l.b16 %v226
    %v298 = vunpack.c.l.b16 %v227
    %v299 = vunpack.c.l.b16 %v228
    %v300 = vunpack.c.l.b16 %v229
    %v301 = vunpack.c.l.b16 %v230
    %v302 = vunpack.c.l.b16 %v231
    %v303 = vunpack.c.l.b16 %v232
    %v304 = vunpack.c.l.b16 %v233
    %v305 = vunpack.c.l.b16 %v234
    %v306 = vunpack.c.l.b16 %v235
    %v307 = vunpack.c.l.b16 %v236
    %v308 = vunpack.c.l.b16 %v237
    %v309 = vunpack.c.l.b16 %v238
    %v310 = vunpack.c.l.b16 %v239
    %v311 = vunpack.c.l.b16 %v240
    %v312 = vunpack.c.l.b16 %v241
    %v313 = vunpack.c.l.b16 %v242
    %v314 = vunpack.c.l.b16 %v243
    %v315 = vunpack.c.l.b16 %v244
    %v316 = vunpack.c.l.b16 %v245
    %v317 = vunpack.c.l.b16 %v246
    %v318 = vunpack.c.l.b16 %v247
    %v319 = vunpack.c.l.b16 %v248
    %v320 = vunpack.c.l.b16 %v249
    %v321 = vunpack.c.l.b16 %v250
    %v322 = vunpack.c.l.b16 %v251
    %v323 = vunpack.c.l.b16 %v252
    %v324 = vunpack.c.l.b16 %v253
    %v325 = vunpack.c.l.b16 %v254
    %v326 = vunpack.c.l.b16 %v255
    %v327 = vpack.c.b16 %v296, %v295
    %v328 = vpack.c.b16 %v298, %v297
    %v329 = vpack.c.b16 %v300, %v299
    %v330 = vpack.c.b16 %v302, %v301
    %v331 = vpack.c.b16 %v304, %v303
    %v332 = vpack.c.b16 %v306, %v305
    %v333 = vpack.c.b16 %v308, %v307
    %v334 = vpack.c.b16 %v310, %v309
    %v335 = vpack.c.b16 %v312, %v311
    %v336 = vpack.c.b16 %v314, %v313
    %v337 = vpack.c.b16 %v316, %v315
    %v338 = vpack.c.b16 %v318, %v317
    %v339 = vpack.c.b16 %v320, %v319
    %v340 = vpack.c.b16 %v322, %v321
    %v341 = vpack.c.b16 %v324, %v323
    %v342 = vpack.c.b16 %v326, %v325
    %359 = vmatprep.subr.bf16.mxu0 0
    %360 = vmatpush1.bf16.msra.mxu0 %v327
    %361 = vmatprep.subr.bf16.mxu0 0
    %362 = vmatpush1.bf16.msra.mxu0 %v328
    %363 = vmatprep.subr.bf16.mxu0 0
    %364 = vmatpush1.bf16.msra.mxu0 %v329
    %365 = vmatprep.subr.bf16.mxu0 0
    %366 = vmatpush1.bf16.msra.mxu0 %v330
    %367 = vmatprep.subr.bf16.mxu0 0
    %368 = vmatpush1.bf16.msra.mxu0 %v331
    %369 = vmatprep.subr.bf16.mxu0 0
    %370 = vmatpush1.bf16.msra.mxu0 %v332
    %371 = vmatprep.subr.bf16.mxu0 0
    %372 = vmatpush1.bf16.msra.mxu0 %v333
    %373 = vmatprep.subr.bf16.mxu0 0
    %374 = vmatpush1.bf16.msra.mxu0 %v334
    %375 = vmatprep.subr.bf16.mxu0 0
    %376 = vmatpush1.bf16.msra.mxu0 %v335
    %377 = vmatprep.subr.bf16.mxu0 0
    %378 = vmatpush1.bf16.msra.mxu0 %v336
    %379 = vmatprep.subr.bf16.mxu0 0
    %380 = vmatpush1.bf16.msra.mxu0 %v337
    %381 = vmatprep.subr.bf16.mxu0 0
    %382 = vmatpush1.bf16.msra.mxu0 %v338
    %383 = vmatprep.subr.bf16.mxu0 0
    %384 = vmatpush1.bf16.msra.mxu0 %v339
    %385 = vmatprep.subr.bf16.mxu0 0
    %386 = vmatpush1.bf16.msra.mxu0 %v340
    %387 = vmatprep.subr.bf16.mxu0 0
    %388 = vmatpush1.bf16.msra.mxu0 %v341
    %389 = vmatprep.subr.bf16.mxu0 0
    %390 = vmatpush1.bf16.msra.mxu0 %v342
    %391 = vmatprep.mubr.bf16.mxu0 %v223
    %392 = vmatmul.mubr.bf16.gmra.mrb[0].mxu0 %v222
    %v393 = vpop.f32.mrb[0].mxu0
    %v394 = vadd.f32 %v261, %v393
    %v395 = vpop.f32.mrb[0].mxu0
    %v396 = vpop.f32.mrb[0].mxu0
    %v397 = vadd.f32 %v261, %v396
    %v398 = vpop.f32.mrb[0].mxu0
    %399 = vdwg.mxu0
    %v400 = vmax.f32 %v394, 0.0
    %v401 = vmax.f32 %v397, 0.0
    %v402 = vadd.s32 %v164, 256
    %v403 = vadd.s32 %v166, %v402
    %v404 = vadd.s32 %v167, %v402
    %v405 = vadd.s32 %v403, %v173
    %v406 = vadd.s32 %v404, %v173
    %v407 = vshrl.u32 %v405, 16
    %v408 = vshrl.u32 %v406, 16
    %v409 = vxor.u32 %v405, %v407
    %v410 = vxor.u32 %v406, %v408
    %v411 = vmul.u32 %v409, 2146121005
    %v412 = vmul.u32 %v410, 2146121005
    %v413 = vshrl.u32 %v411, 15
    %v414 = vshrl.u32 %v412, 15
    %v415 = vxor.u32 %v411, %v413
    %v416 = vxor.u32 %v412, %v414
    %v417 = vmul.u32 %v415, 2221713035
    %v418 = vmul.u32 %v416, 2221713035
    %v419 = vshrl.u32 %v417, 16
    %v420 = vshrl.u32 %v418, 16
    %v421 = vxor.u32 %v417, %v419
    %v422 = vxor.u32 %v418, %v420
    %vm423 = vcmp.ge.u32.totalorder %v421, 2147483648
    %vm424 = vcmp.ge.u32.totalorder %v422, 2147483648
    %v425 = vmul.f32 %v400, 2.0
    %v426 = vmul.f32 %v401, 2.0
    %v427 = vsel %vm423, %v425, 0.0
    %v428 = vsel %vm424, %v426, 0.0
    %429 = vst [vmem:[#allocation10] sm:$0xff] %v427
    %430 = vst [vmem:[#allocation10 + $0x8] sm:$0xff] %v428
    // Predicated region
    $region34: #{tpu_custom_call.1} parent=1 // pred_check
      _
    $region35: #{tpu_custom_call.1} parent=1 // pred_check_branch
      %432 = sbr.rel (0) target = $region37
    $region36: #{tpu_custom_call.1} parent=1 // pred_region
      %s434 = ssub.s32 256, 256
      %435 = vsyncadd [#allocation6], %s434
      %s436 = sshll.u32 [#allocation10], 4
      %s437 = int_to_ptr.vmem [resolvable:$true] %s436
      %442 = dma.vmem_to_hbm [thread:$0]  %s437, 256, %s6, [#allocation6], 128, 128, 8
    $region37: #{tpu_custom_call.1} parent=1 // pred_fallthru
      _
    // Predicated region
    $region38: #{tpu_custom_call.1} parent=1 // pred_check
      _
    $region39: #{tpu_custom_call.1} parent=1 // pred_check_branch
      %444 = sbr.rel (0) target = $region41
    $region40: #{tpu_custom_call.1} parent=1 // pred_region
      %445 = dma.done [#allocation6], 256
    $region41: #{tpu_custom_call.1} parent=1 // pred_fallthru
      _
    %446 = vsyncpa [#allocation5], 1
    %447 = vsyncpa [#allocation8], 1
    %448 = vsyncpa [#allocation6], 1

</llo_original>
